<compile_context>
chip_gen: v7x
topology: tpu7x:2x2x1
jax: 0.10.0
libtpu: 0.0.40
codegen_flags: <defaults>
</compile_context>

<pallas_src>
import jax
import jax.numpy as jnp
from jax.experimental import pallas as pl
from jax.experimental.pallas import tpu as pltpu

IN_F = 9
HID = 40
OUT_F = 2


def _mlp_kernel(x_ref, w1_ref, w_stack_ref, b_all_ref, o_ref):
    x = x_ref[...]                      # [TB, 9]  (pipelined tile)
    b = b_all_ref[...]                  # [4, 40]  (resident)

    # fc1 + ReLU
    h = jnp.dot(x, w1_ref[...], preferred_element_type=jnp.float32) + b[0:1, :]
    h = jnp.maximum(h, 0.0)
    # fc2 + ReLU
    h = jnp.dot(h, w_stack_ref[0], preferred_element_type=jnp.float32) + b[1:2, :]
    h = jnp.maximum(h, 0.0)
    # dropout1 (p=0.1): identity at inference time.
    # fc3 + ReLU
    h = jnp.dot(h, w_stack_ref[1], preferred_element_type=jnp.float32) + b[2:3, :]
    h = jnp.maximum(h, 0.0)
    # fc4 (zero-padded to [40, 40]; only the first 2 output columns are real logits)
    logits = jnp.dot(h, w_stack_ref[2], preferred_element_type=jnp.float32) + b[3:4, :]

    # Closed-form 2-class softmax: p1 = sigmoid(l1 - l0), p0 = 1 - p1.
    d = logits[:, 1:2] - logits[:, 0:1]                    # [TB, 1]
    p1 = 1.0 / (1.0 + jnp.exp(-d))                         # exact recip; keeps 1e-5 tolerance
    p0 = 1.0 - p1
    col = jax.lax.broadcasted_iota(jnp.int32, o_ref.shape, 1)   # [TB, 2]
    o_ref[...] = jnp.where(col == 0, p0, p1).astype(o_ref.dtype)


def _round_up(n, m):
    return (n + m - 1) // m * m


def mymodule5_forward(x, params, *, block_b=1024):
    """x: [B, 9] float32. params: dict name -> (w [in, out], b [out])."""
    B = x.shape[0]
    w1, b1 = params["fc1"]
    w2, b2 = params["fc2"]
    w3, b3 = params["fc3"]
    w4, b4 = params["fc4"]

    # Pack resident parameters.
    w4p = jnp.zeros((HID, HID), jnp.float32).at[:, :OUT_F].set(w4)
    w_stack = jnp.stack([w2, w3, w4p], axis=0)            # [3, 40, 40]
    b_all = jnp.zeros((4, HID), jnp.float32)
    b_all = b_all.at[0].set(b1).at[1].set(b2).at[2].set(b3).at[3, :OUT_F].set(b4)

    # Batch tiling: tile is a multiple of 8 sublanes; pad B up to a multiple of the tile.
    tb = min(block_b, _round_up(B, 8))
    padded_b = _round_up(B, tb)
    xp = x if padded_b == B else jnp.pad(x, ((0, padded_b - B), (0, 0)))
    grid = (padded_b // tb,)

    flops = 2 * padded_b * (IN_F * HID + HID * HID + HID * HID + HID * OUT_F)
    bytes_accessed = padded_b * (IN_F + OUT_F) * 4 + (w1.size + w_stack.size + b_all.size) * 4
    cost = pl.CostEstimate(flops=flops, transcendentals=padded_b,
                           bytes_accessed=bytes_accessed)

    out = pl.pallas_call(
        _mlp_kernel,
        out_shape=jax.ShapeDtypeStruct((padded_b, OUT_F), jnp.float32),
        grid=grid,
        in_specs=[
            pl.BlockSpec((tb, IN_F), lambda i: (i, 0)),          # x tile (pipelined)
            pl.BlockSpec((IN_F, HID), lambda i: (0, 0)),         # w1 (resident)
            pl.BlockSpec((3, HID, HID), lambda i: (0, 0, 0)),    # w2/w3/w4pad (resident)
            pl.BlockSpec((4, HID), lambda i: (0, 0)),            # biases (resident)
        ],
        out_specs=pl.BlockSpec((tb, OUT_F), lambda i: (i, 0)),
        compiler_params=pltpu.CompilerParams(
            dimension_semantics=("parallel",),
        ),
        cost_estimate=cost,
    )(xp, w1, w_stack, b_all)

    return out[:B] if padded_b != B else out


def init_params(key, bias_value=0.0):
    """Xavier-uniform weights (weight_mode=default), constant bias. W stored as [in, out]."""
    def xavier_uniform(k, fan_in, fan_out):
        limit = jnp.sqrt(6.0 / (fan_in + fan_out))
        return jax.random.uniform(k, (fan_in, fan_out), jnp.float32, -limit, limit)

    ks = jax.random.split(key, 4)
    dims = [(IN_F, HID), (HID, HID), (HID, HID), (HID, OUT_F)]
    names = ["fc1", "fc2", "fc3", "fc4"]
    params = {}
    for k, (fi, fo), name in zip(ks, dims, names):
        params[name] = (xavier_uniform(k, fi, fo),
                        jnp.full((fo,), bias_value, jnp.float32))
    return params


def reference_forward(x, params):
    h = x
    for name in ["fc1", "fc2", "fc3"]:
        w, b = params[name]
        h = jnp.maximum(h @ w + b, 0.0)
    w, b = params["fc4"]
    return jax.nn.softmax(h @ w + b, axis=-1)


if __name__ == "__main__":
    key = jax.random.PRNGKey(0)
    k_x1, k_x2, k_p = jax.random.split(key, 3)

    params = init_params(k_p)

    # Small batch (single grid step).
    B1 = 8
    x1 = jax.random.normal(k_x1, (B1, IN_F), jnp.float32)
    out1 = jax.block_until_ready(mymodule5_forward(x1, params))
    ref1 = reference_forward(x1, params)
    assert out1.shape == (B1, OUT_F)
    assert jnp.allclose(out1, ref1, atol=1e-5, rtol=1e-5)
    assert jnp.allclose(jnp.sum(out1, axis=-1), jnp.ones((B1,)), atol=1e-5)

    # Larger, non-multiple batch to exercise the tiled grid + tail padding path.
    B2 = 300
    x2 = jax.random.normal(k_x2, (B2, IN_F), jnp.float32)
    out2 = jax.block_until_ready(mymodule5_forward(x2, params, block_b=128))
    ref2 = reference_forward(x2, params)
    assert out2.shape == (B2, OUT_F)
    assert jnp.allclose(out2, ref2, atol=1e-5, rtol=1e-5)

    print("KERNEL_OK")
</pallas_src>

<mosaic_0001>
module attributes {stable_mosaic.version = 11 : i64} {
  func.func @_mlp_kernel(%arg0: i32, %arg1: memref<8x9xf32, #tpu.memory_space<vmem>>, %arg2: memref<9x40xf32, #tpu.memory_space<vmem>>, %arg3: memref<3x40x40xf32, #tpu.memory_space<vmem>>, %arg4: memref<4x40xf32, #tpu.memory_space<vmem>>, %arg5: memref<8x2xf32, #tpu.memory_space<vmem>>) attributes {dimension_semantics = [#tpu.dimension_semantics<parallel>], iteration_bounds = array<i64: 1>, scalar_prefetch = 0 : i64, scratch_operands = 0 : i64, tpu.core_type = #tpu.core_type<tc>, window_params = [{transform_indices = @transform_0, window_bounds = array<i64: 8, 9>}, {pipeline_mode = #tpu.pipeline_mode<synchronous>, transform_indices = @transform_1, window_bounds = array<i64: 9, 40>}, {pipeline_mode = #tpu.pipeline_mode<synchronous>, transform_indices = @transform_2, window_bounds = array<i64: 3, 40, 40>}, {pipeline_mode = #tpu.pipeline_mode<synchronous>, transform_indices = @transform_3, window_bounds = array<i64: 4, 40>}, {transform_indices = @transform_4, window_bounds = array<i64: 8, 2>}]} {
    %c0 = arith.constant 0 : index
    %c0_0 = arith.constant 0 : index
    %0 = vector.load %arg1[%c0, %c0_0] : memref<8x9xf32, #tpu.memory_space<vmem>>, vector<8x9xf32>
    %c0_1 = arith.constant 0 : index
    %c0_2 = arith.constant 0 : index
    %1 = vector.load %arg4[%c0_1, %c0_2] : memref<4x40xf32, #tpu.memory_space<vmem>>, vector<4x40xf32>
    %c0_3 = arith.constant 0 : index
    %c0_4 = arith.constant 0 : index
    %2 = vector.load %arg2[%c0_3, %c0_4] : memref<9x40xf32, #tpu.memory_space<vmem>>, vector<9x40xf32>
    %cst = arith.constant dense<0.000000e+00> : vector<8x40xf32>
    %3 = tpu.matmul %0, %2, %cst {dimension_numbers = #tpu.dot_dimension_numbers<[1], [0], [0], [1], [0, 0, 1, 1], [], []>} : vector<8x9xf32>, vector<9x40xf32>, vector<8x40xf32> -> vector<8x40xf32>
    %4 = vector.extract_strided_slice %1 {offsets = [0, 0], sizes = [1, 40], strides = [1, 1]} : vector<4x40xf32> to vector<1x40xf32>
    %5 = vector.broadcast %4 : vector<1x40xf32> to vector<8x40xf32>
    %6 = arith.addf %3, %5 : vector<8x40xf32>
    %cst_5 = arith.constant 0.000000e+00 : f32
    %7 = vector.broadcast %cst_5 : f32 to vector<8x40xf32>
    %8 = arith.maximumf %6, %7 : vector<8x40xf32>
    %c0_6 = arith.constant 0 : index
    %c0_7 = arith.constant 0 : index
    %c0_8 = arith.constant 0 : index
    %9 = vector.load %arg3[%c0_6, %c0_7, %c0_8] : memref<3x40x40xf32, #tpu.memory_space<vmem>>, vector<1x40x40xf32>
    %10 = vector.shape_cast %9 : vector<1x40x40xf32> to vector<40x40xf32>
    %cst_9 = arith.constant dense<0.000000e+00> : vector<8x40xf32>
    %11 = tpu.matmul %8, %10, %cst_9 {dimension_numbers = #tpu.dot_dimension_numbers<[1], [0], [0], [1], [0, 0, 1, 1], [], []>} : vector<8x40xf32>, vector<40x40xf32>, vector<8x40xf32> -> vector<8x40xf32>
    %12 = vector.extract_strided_slice %1 {offsets = [1, 0], sizes = [1, 40], strides = [1, 1]} : vector<4x40xf32> to vector<1x40xf32>
    %13 = vector.broadcast %12 : vector<1x40xf32> to vector<8x40xf32>
    %14 = arith.addf %11, %13 : vector<8x40xf32>
    %cst_10 = arith.constant 0.000000e+00 : f32
    %15 = vector.broadcast %cst_10 : f32 to vector<8x40xf32>
    %16 = arith.maximumf %14, %15 : vector<8x40xf32>
    %c1 = arith.constant 1 : index
    %c0_11 = arith.constant 0 : index
    %c0_12 = arith.constant 0 : index
    %17 = vector.load %arg3[%c1, %c0_11, %c0_12] : memref<3x40x40xf32, #tpu.memory_space<vmem>>, vector<1x40x40xf32>
    %18 = vector.shape_cast %17 : vector<1x40x40xf32> to vector<40x40xf32>
    %cst_13 = arith.constant dense<0.000000e+00> : vector<8x40xf32>
    %19 = tpu.matmul %16, %18, %cst_13 {dimension_numbers = #tpu.dot_dimension_numbers<[1], [0], [0], [1], [0, 0, 1, 1], [], []>} : vector<8x40xf32>, vector<40x40xf32>, vector<8x40xf32> -> vector<8x40xf32>
    %20 = vector.extract_strided_slice %1 {offsets = [2, 0], sizes = [1, 40], strides = [1, 1]} : vector<4x40xf32> to vector<1x40xf32>
    %21 = vector.broadcast %20 : vector<1x40xf32> to vector<8x40xf32>
    %22 = arith.addf %19, %21 : vector<8x40xf32>
    %cst_14 = arith.constant 0.000000e+00 : f32
    %23 = vector.broadcast %cst_14 : f32 to vector<8x40xf32>
    %24 = arith.maximumf %22, %23 : vector<8x40xf32>
    %c2 = arith.constant 2 : index
    %c0_15 = arith.constant 0 : index
    %c0_16 = arith.constant 0 : index
    %25 = vector.load %arg3[%c2, %c0_15, %c0_16] : memref<3x40x40xf32, #tpu.memory_space<vmem>>, vector<1x40x40xf32>
    %26 = vector.shape_cast %25 : vector<1x40x40xf32> to vector<40x40xf32>
    %cst_17 = arith.constant dense<0.000000e+00> : vector<8x40xf32>
    %27 = tpu.matmul %24, %26, %cst_17 {dimension_numbers = #tpu.dot_dimension_numbers<[1], [0], [0], [1], [0, 0, 1, 1], [], []>} : vector<8x40xf32>, vector<40x40xf32>, vector<8x40xf32> -> vector<8x40xf32>
    %28 = vector.extract_strided_slice %1 {offsets = [3, 0], sizes = [1, 40], strides = [1, 1]} : vector<4x40xf32> to vector<1x40xf32>
    %29 = vector.broadcast %28 : vector<1x40xf32> to vector<8x40xf32>
    %30 = arith.addf %27, %29 : vector<8x40xf32>
    %31 = vector.extract_strided_slice %30 {offsets = [0, 1], sizes = [8, 1], strides = [1, 1]} : vector<8x40xf32> to vector<8x1xf32>
    %32 = vector.extract_strided_slice %30 {offsets = [0, 0], sizes = [8, 1], strides = [1, 1]} : vector<8x40xf32> to vector<8x1xf32>
    %33 = arith.subf %31, %32 : vector<8x1xf32>
    %cst_18 = arith.constant 0.000000e+00 : f32
    %34 = vector.broadcast %cst_18 : f32 to vector<8x1xf32>
    %35 = arith.subf %34, %33 : vector<8x1xf32>
    %36 = math.exp %35 : vector<8x1xf32>
    %cst_19 = arith.constant 1.000000e+00 : f32
    %37 = vector.broadcast %cst_19 : f32 to vector<8x1xf32>
    %38 = arith.addf %37, %36 : vector<8x1xf32>
    %cst_20 = arith.constant 1.000000e+00 : f32
    %39 = vector.broadcast %cst_20 : f32 to vector<8x1xf32>
    %40 = arith.divf %39, %38 : vector<8x1xf32>
    %cst_21 = arith.constant 1.000000e+00 : f32
    %41 = vector.broadcast %cst_21 : f32 to vector<8x1xf32>
    %42 = arith.subf %41, %40 : vector<8x1xf32>
    %43 = tpu.iota {dimensions = array<i32: 1>} : vector<8x2xi32>
    %c0_i32 = arith.constant 0 : i32
    %44 = vector.broadcast %c0_i32 : i32 to vector<8x2xi32>
    %45 = arith.cmpi eq, %43, %44 : vector<8x2xi32>
    %46 = vector.shape_cast %42 : vector<8x1xf32> to vector<8x1xf32>
    %47 = vector.broadcast %46 : vector<8x1xf32> to vector<8x2xf32>
    %48 = vector.shape_cast %40 : vector<8x1xf32> to vector<8x1xf32>
    %49 = vector.broadcast %48 : vector<8x1xf32> to vector<8x2xf32>
    %50 = arith.select %45, %47, %49 : vector<8x2xi1>, vector<8x2xf32>
    %c0_22 = arith.constant 0 : index
    %c0_23 = arith.constant 0 : index
    %51 = vector.load %arg5[%c0_22, %c0_23] : memref<8x2xf32, #tpu.memory_space<vmem>>, vector<8x2xf32>
    tpu.vector_store %arg5[%c0_22, %c0_23], %50 {strides = array<i32>} : memref<8x2xf32, #tpu.memory_space<vmem>>, vector<8x2xf32>,
    return
  }
  func.func @transform_0(%arg0: i32) -> (i32, i32) {
    %c0_i32 = arith.constant 0 : i32
    %c0_i32_0 = arith.constant 0 : i32
    return %arg0, %c0_i32 : i32, i32
  }
  func.func @transform_1(%arg0: i32) -> (i32, i32) {
    %c0_i32 = arith.constant 0 : i32
    %c0_i32_0 = arith.constant 0 : i32
    %c0_i32_1 = arith.constant 0 : i32
    return %c0_i32, %c0_i32_0 : i32, i32
  }
  func.func @transform_2(%arg0: i32) -> (i32, i32, i32) {
    %c0_i32 = arith.constant 0 : i32
    %c0_i32_0 = arith.constant 0 : i32
    %c0_i32_1 = arith.constant 0 : i32
    %c0_i32_2 = arith.constant 0 : i32
    return %c0_i32, %c0_i32_0, %c0_i32_1 : i32, i32, i32
  }
  func.func @transform_3(%arg0: i32) -> (i32, i32) {
    %c0_i32 = arith.constant 0 : i32
    %c0_i32_0 = arith.constant 0 : i32
    %c0_i32_1 = arith.constant 0 : i32
    return %c0_i32, %c0_i32_0 : i32, i32
  }
  func.func @transform_4(%arg0: i32) -> (i32, i32) {
    %c0_i32 = arith.constant 0 : i32
    %c0_i32_0 = arith.constant 0 : i32
    return %arg0, %c0_i32 : i32, i32
  }
}

</mosaic_0001>

<llo_original>
// kernel: tpu_custom_call.1
$region0: #{tpu_custom_call.1}
  #allocation0 [shape = 'u32[]', space=smem, size = 0x4, offset = 0x4, fixed_abs, tag = 'smem constant byte address 0x4 - core index']
  #allocation1 [shape = 'u32[144,128]{1,0:T(1,128)}', space=vmem, size = 0x12000, scoped, tag = 'internal scratch']
  %s0 = inlined_call_operand.hbm [shape: f32[8,9], index: 0, kind: input, shape index: {}]
  %s1 = inlined_call_operand.hbm [shape: f32[9,40], index: 1, kind: input, shape index: {}]
  %s2 = inlined_call_operand.hbm [shape: f32[3,40,40], index: 2, kind: input, shape index: {}]
  %s3 = inlined_call_operand.vmem [shape: f32[4,40], index: 3, kind: input, shape index: {}]
  %s4 = inlined_call_operand.vmem [shape: f32[8,2], index: 4, kind: output, shape index: {}]
  %s5 = sld [smem:[#allocation0]]
  $region38: #{tpu_custom_call.1} parent=0
    _
  %s7 = ssub.s32 1, %s5
  %s8 = scalar_select 0, %s7, %s5
  $region1: #{tpu_custom_call.1} parent=0
    #allocation2 [shape = 'u8[4096]{0}', space=vmem, size = 0x1000, scoped, tag = 'input window, operand 0, single buffered']
    #allocation3 [shape = 's32[1]{0}', space=sflag, size = 0x4, scoped, tag = 'scoped memory for tpu_custom_call.1']
    #allocation4 [shape = 'u8[8192]{0}', space=vmem, size = 0x2000, scoped, tag = 'input window, operand 1, single buffered']
    #allocation5 [shape = 's32[1]{0}', space=sflag, size = 0x4, scoped, tag = 'scoped memory for tpu_custom_call.1']
    #allocation6 [shape = 'u8[61440]{0}', space=vmem, size = 0xf000, scoped, tag = 'input window, operand 2, single buffered']
    %9 = vsyncpa [#allocation3], 0
    %10 = vsyncpa [#allocation5], 0
    // Predicated region
    $region2: #{tpu_custom_call.1} parent=1 // pred_check
      _
    $region3: #{tpu_custom_call.1} parent=1 // pred_check_branch
      %12 = sbr.rel (0) target = $region5
    $region4: #{tpu_custom_call.1} parent=1 // pred_region
      %s14 = ssub.s32 128, 128
      %15 = vsyncadd [#allocation3], %s14
      %s17 = sshll.u32 [#allocation2], 4
      %s18 = int_to_ptr.vmem [resolvable:$true] %s17
      %20 = dma.hbm_to_vmem [thread:$0]  %s0, 128, %s18, [#allocation3]
    $region5: #{tpu_custom_call.1} parent=1 // pred_fallthru
      _
    // Predicated region
    $region6: #{tpu_custom_call.1} parent=1 // pred_check
      _
    $region7: #{tpu_custom_call.1} parent=1 // pred_check_branch
      %22 = sbr.rel (0) target = $region9
    $region8: #{tpu_custom_call.1} parent=1 // pred_region
      %s24 = ssub.s32 256, 256
      %25 = vsyncadd [#allocation5], %s24
      %s26 = sshll.u32 [#allocation4], 4
      %s27 = int_to_ptr.vmem [resolvable:$true] %s26
      %32 = dma.hbm_to_vmem [thread:$0]  %s1, 256, %s27, [#allocation5], 128, 128, 8
    $region9: #{tpu_custom_call.1} parent=1 // pred_fallthru
      _
    // Predicated region
    $region10: #{tpu_custom_call.1} parent=1 // pred_check
      _
    $region11: #{tpu_custom_call.1} parent=1 // pred_check_branch
      %34 = sbr.rel (0) target = $region13
    $region12: #{tpu_custom_call.1} parent=1 // pred_region
      %s36 = ssub.s32 1920, 1920
      %37 = vsyncadd [#allocation5], %s36
      %s38 = sshll.u32 [#allocation6], 4
      %s39 = int_to_ptr.vmem [resolvable:$true] %s38
      %44 = dma.hbm_to_vmem [thread:$0]  %s2, 1920, %s39, [#allocation5], 128, 128, 8
    $region13: #{tpu_custom_call.1} parent=1 // pred_fallthru
      _
    // Predicated region
    $region14: #{tpu_custom_call.1} parent=1 // pred_check
      _
    $region15: #{tpu_custom_call.1} parent=1 // pred_check_branch
      %46 = sbr.rel (0) target = $region17
    $region16: #{tpu_custom_call.1} parent=1 // pred_region
      _
    $region17: #{tpu_custom_call.1} parent=1 // pred_fallthru
      _
    // Predicated region
    $region18: #{tpu_custom_call.1} parent=1 // pred_check
      _
    $region19: #{tpu_custom_call.1} parent=1 // pred_check_branch
      %48 = sbr.rel (0) target = $region21
    $region20: #{tpu_custom_call.1} parent=1 // pred_region
      %49 = dma.done [#allocation3], 128
    $region21: #{tpu_custom_call.1} parent=1 // pred_fallthru
      _
    // Predicated region
    $region22: #{tpu_custom_call.1} parent=1 // pred_check
      _
    $region23: #{tpu_custom_call.1} parent=1 // pred_check_branch
      %51 = sbr.rel (0) target = $region25
    $region24: #{tpu_custom_call.1} parent=1 // pred_region
      %52 = dma.done [#allocation5], 256
    $region25: #{tpu_custom_call.1} parent=1 // pred_fallthru
      _
    // Predicated region
    $region26: #{tpu_custom_call.1} parent=1 // pred_check
      _
    $region27: #{tpu_custom_call.1} parent=1 // pred_check_branch
      %54 = sbr.rel (0) target = $region29
    $region28: #{tpu_custom_call.1} parent=1 // pred_region
      %55 = dma.done [#allocation5], 1920
    $region29: #{tpu_custom_call.1} parent=1 // pred_fallthru
      _
    %v56 = vld [vmem:[#allocation2] sm:$0xff]
    %v57 = vld [vmem:[%s3] sm:$0xf]
    %v58 = vld [vmem:[#allocation4] sm:$0xff]
    %v59 = vld [vmem:[#allocation4 + $0x8] sm:$0x1]
    %v60 = vlaneseq
    %v61 = vshrl.u32 %v60, 7
    %v62 = vsub.s32 0, %v61
    %v63 = vrot.slane %v57, %v62
    %vm64 = vcmask 72704
    %v66 = vsel %vm64, %v56, 0
    %vm68 = vcmask 1040384
    %v70 = vsel %vm68, %v59, 0
    %72 = vmatprep.subr.mxu0 0.0
    %73 = vmatpush1.msra.mxu0 %v58
    %74 = vmatprep.subr.mxu0 0.0
    %75 = vmatpush1.msra.mxu0 %v70
    %76 = vmatprep.subr.mxu0 0.0
    %77 = vmatpush1.msra.mxu0 0.0
    %78 = vmatprep.subr.mxu0 0.0
    %79 = vmatpush1.msra.mxu0 0.0
    %80 = vmatprep.subr.mxu0 0.0
    %81 = vmatpush1.msra.mxu0 0.0
    %82 = vmatprep.subr.mxu0 0.0
    %83 = vmatpush1.msra.mxu0 0.0
    %84 = vmatprep.subr.mxu0 0.0
    %85 = vmatpush1.msra.mxu0 0.0
    %86 = vmatprep.subr.mxu0 0.0
    %87 = vmatpush1.msra.mxu0 0.0
    %88 = vmatprep.subr.mxu0 0.0
    %89 = vmatpush1.msra.mxu0 0.0
    %90 = vmatprep.subr.mxu0 0.0
    %91 = vmatpush1.msra.mxu0 0.0
    %92 = vmatprep.subr.mxu0 0.0
    %93 = vmatpush1.msra.mxu0 0.0
    %94 = vmatprep.subr.mxu0 0.0
    %95 = vmatpush1.msra.mxu0 0.0
    %96 = vmatprep.subr.mxu0 0.0
    %97 = vmatpush1.msra.mxu0 0.0
    %98 = vmatprep.subr.mxu0 0.0
    %99 = vmatpush1.msra.mxu0 0.0
    %100 = vmatprep.subr.mxu0 0.0
    %101 = vmatpush1.msra.mxu0 0.0
    %102 = vmatprep.subr.mxu0 0.0
    %103 = vmatpush1.msra.mxu0 0.0
    %104 = vmatprep.subr.mxu0 0.0
    %105 = vmatpush1.msra.mxu0 0.0
    %106 = vmatprep.subr.mxu0 0.0
    %107 = vmatpush1.msra.mxu0 0.0
    %108 = vmatprep.subr.mxu0 0.0
    %109 = vmatpush1.msra.mxu0 0.0
    %110 = vmatprep.subr.mxu0 0.0
    %111 = vmatpush1.msra.mxu0 0.0
    %112 = vmatprep.subr.mxu0 0.0
    %113 = vmatpush1.msra.mxu0 0.0
    %114 = vmatprep.subr.mxu0 0.0
    %115 = vmatpush1.msra.mxu0 0.0
    %116 = vmatprep.subr.mxu0 0.0
    %117 = vmatpush1.msra.mxu0 0.0
    %118 = vmatprep.subr.mxu0 0.0
    %119 = vmatpush1.msra.mxu0 0.0
    %120 = vmatprep.subr.mxu0 0.0
    %121 = vmatpush1.msra.mxu0 0.0
    %122 = vmatprep.subr.mxu0 0.0
    %123 = vmatpush1.msra.mxu0 0.0
    %124 = vmatprep.subr.mxu0 0.0
    %125 = vmatpush1.msra.mxu0 0.0
    %126 = vmatprep.subr.mxu0 0.0
    %127 = vmatpush1.msra.mxu0 0.0
    %128 = vmatprep.subr.mxu0 0.0
    %129 = vmatpush1.msra.mxu0 0.0
    %130 = vmatprep.subr.mxu0 0.0
    %131 = vmatpush1.msra.mxu0 0.0
    %132 = vmatprep.subr.mxu0 0.0
    %133 = vmatpush1.msra.mxu0 0.0
    %134 = vmatprep.subr.mxu0 0.0
    %135 = vmatpush1.msra.mxu0 0.0
    %136 = vmatprep.mubr.f32.mxu0 0.0
    %137 = vmatmul.mubr.f32.gmra.mrb[0].mxu0 %v66
    %v138 = vpop.f32.mrb[0].mxu0
    %v139 = vadd.f32 %v63, %v138
    %v140 = vpop.f32.mrb[0].mxu0
    %141 = vdwg.mxu0
    %v142 = vmax.f32 %v139, 0.0
    %v143 = vld [vmem:[#allocation6] sm:$0xff]
    %v144 = vld [vmem:[#allocation6 + $0x8] sm:$0xff]
    %v145 = vld [vmem:[#allocation6 + $0x10] sm:$0xff]
    %v146 = vld [vmem:[#allocation6 + $0x18] sm:$0xff]
    %v147 = vld [vmem:[#allocation6 + $0x20] sm:$0xff]
    %v148 = vlaneseq
    %v149 = vshrl.u32 %v148, 7
    %v150 = vsub.s32 1, %v149
    %v151 = vrot.slane %v57, %v150
    %vm152 = vcmask 326656
    %v154 = vsel %vm152, %v142, 0
    %156 = vmatprep.subr.mxu0 0.0
    %157 = vmatpush1.msra.mxu0 %v143
    %158 = vmatprep.subr.mxu0 0.0
    %159 = vmatpush1.msra.mxu0 %v144
    %160 = vmatprep.subr.mxu0 0.0
    %161 = vmatpush1.msra.mxu0 %v145
    %162 = vmatprep.subr.mxu0 0.0
    %163 = vmatpush1.msra.mxu0 %v146
    %164 = vmatprep.subr.mxu0 0.0
    %165 = vmatpush1.msra.mxu0 %v147
    %166 = vmatprep.subr.mxu0 0.0
    %167 = vmatpush1.msra.mxu0 0.0
    %168 = vmatprep.subr.mxu0 0.0
    %169 = vmatpush1.msra.mxu0 0.0
    %170 = vmatprep.subr.mxu0 0.0
    %171 = vmatpush1.msra.mxu0 0.0
    %172 = vmatprep.subr.mxu0 0.0
    %173 = vmatpush1.msra.mxu0 0.0
    %174 = vmatprep.subr.mxu0 0.0
    %175 = vmatpush1.msra.mxu0 0.0
    %176 = vmatprep.subr.mxu0 0.0
    %177 = vmatpush1.msra.mxu0 0.0
    %178 = vmatprep.subr.mxu0 0.0
    %179 = vmatpush1.msra.mxu0 0.0
    %180 = vmatprep.subr.mxu0 0.0
    %181 = vmatpush1.msra.mxu0 0.0
    %182 = vmatprep.subr.mxu0 0.0
    %183 = vmatpush1.msra.mxu0 0.0
    %184 = vmatprep.subr.mxu0 0.0
    %185 = vmatpush1.msra.mxu0 0.0
    %186 = vmatprep.subr.mxu0 0.0
    %187 = vmatpush1.msra.mxu0 0.0
    %188 = vmatprep.subr.mxu0 0.0
    %189 = vmatpush1.msra.mxu0 0.0
    %190 = vmatprep.subr.mxu0 0.0
    %191 = vmatpush1.msra.mxu0 0.0
    %192 = vmatprep.subr.mxu0 0.0
    %193 = vmatpush1.msra.mxu0 0.0
    %194 = vmatprep.subr.mxu0 0.0
    %195 = vmatpush1.msra.mxu0 0.0
    %196 = vmatprep.subr.mxu0 0.0
    %197 = vmatpush1.msra.mxu0 0.0
    %198 = vmatprep.subr.mxu0 0.0
    %199 = vmatpush1.msra.mxu0 0.0
    %200 = vmatprep.subr.mxu0 0.0
    %201 = vmatpush1.msra.mxu0 0.0
    %202 = vmatprep.subr.mxu0 0.0
    %203 = vmatpush1.msra.mxu0 0.0
    %204 = vmatprep.subr.mxu0 0.0
    %205 = vmatpush1.msra.mxu0 0.0
    %206 = vmatprep.subr.mxu0 0.0
    %207 = vmatpush1.msra.mxu0 0.0
    %208 = vmatprep.subr.mxu0 0.0
    %209 = vmatpush1.msra.mxu0 0.0
    %210 = vmatprep.subr.mxu0 0.0
    %211 = vmatpush1.msra.mxu0 0.0
    %212 = vmatprep.subr.mxu0 0.0
    %213 = vmatpush1.msra.mxu0 0.0
    %214 = vmatprep.subr.mxu0 0.0
    %215 = vmatpush1.msra.mxu0 0.0
    %216 = vmatprep.subr.mxu0 0.0
    %217 = vmatpush1.msra.mxu0 0.0
    %218 = vmatprep.subr.mxu0 0.0
    %219 = vmatpush1.msra.mxu0 0.0
    %220 = vmatprep.mubr.f32.mxu0 0.0
    %221 = vmatmul.mubr.f32.gmra.mrb[0].mxu0 %v154
    %v222 = vpop.f32.mrb[0].mxu0
    %v223 = vadd.f32 %v151, %v222
    %v224 = vpop.f32.mrb[0].mxu0
    %225 = vdwg.mxu0
    %v226 = vmax.f32 %v223, 0.0
    %s227 = scalar_lea.vmem [#allocation6], 40
    %v228 = vld [vmem:[%s227] sm:$0xff]
    %v229 = vld [vmem:[%s227 + $0x8] sm:$0xff]
    %v230 = vld [vmem:[%s227 + $0x10] sm:$0xff]
    %v231 = vld [vmem:[%s227 + $0x18] sm:$0xff]
    %v232 = vld [vmem:[%s227 + $0x20] sm:$0xff]
    %v233 = vlaneseq
    %v234 = vshrl.u32 %v233, 7
    %v235 = vsub.s32 2, %v234
    %v236 = vrot.slane %v57, %v235
    %v238 = vsel %vm152, %v226, 0
    %240 = vmatprep.subr.mxu0 0.0
    %241 = vmatpush1.msra.mxu0 %v228
    %242 = vmatprep.subr.mxu0 0.0
    %243 = vmatpush1.msra.mxu0 %v229
    %244 = vmatprep.subr.mxu0 0.0
    %245 = vmatpush1.msra.mxu0 %v230
    %246 = vmatprep.subr.mxu0 0.0
    %247 = vmatpush1.msra.mxu0 %v231
    %248 = vmatprep.subr.mxu0 0.0
    %249 = vmatpush1.msra.mxu0 %v232
    %250 = vmatprep.subr.mxu0 0.0
    %251 = vmatpush1.msra.mxu0 0.0
    %252 = vmatprep.subr.mxu0 0.0
    %253 = vmatpush1.msra.mxu0 0.0
    %254 = vmatprep.subr.mxu0 0.0
    %255 = vmatpush1.msra.mxu0 0.0
    %256 = vmatprep.subr.mxu0 0.0
    %257 = vmatpush1.msra.mxu0 0.0
    %258 = vmatprep.subr.mxu0 0.0
    %259 = vmatpush1.msra.mxu0 0.0
    %260 = vmatprep.subr.mxu0 0.0
    %261 = vmatpush1.msra.mxu0 0.0
    %262 = vmatprep.subr.mxu0 0.0
    %263 = vmatpush1.msra.mxu0 0.0
    %264 = vmatprep.subr.mxu0 0.0
    %265 = vmatpush1.msra.mxu0 0.0
    %266 = vmatprep.subr.mxu0 0.0
    %267 = vmatpush1.msra.mxu0 0.0
    %268 = vmatprep.subr.mxu0 0.0
    %269 = vmatpush1.msra.mxu0 0.0
    %270 = vmatprep.subr.mxu0 0.0
    %271 = vmatpush1.msra.mxu0 0.0
    %272 = vmatprep.subr.mxu0 0.0
    %273 = vmatpush1.msra.mxu0 0.0
    %274 = vmatprep.subr.mxu0 0.0
    %275 = vmatpush1.msra.mxu0 0.0
    %276 = vmatprep.subr.mxu0 0.0
    %277 = vmatpush1.msra.mxu0 0.0
    %278 = vmatprep.subr.mxu0 0.0
    %279 = vmatpush1.msra.mxu0 0.0
    %280 = vmatprep.subr.mxu0 0.0
    %281 = vmatpush1.msra.mxu0 0.0
    %282 = vmatprep.subr.mxu0 0.0
    %283 = vmatpush1.msra.mxu0 0.0
    %284 = vmatprep.subr.mxu0 0.0
    %285 = vmatpush1.msra.mxu0 0.0
    %286 = vmatprep.subr.mxu0 0.0
    %287 = vmatpush1.msra.mxu0 0.0
    %288 = vmatprep.subr.mxu0 0.0
    %289 = vmatpush1.msra.mxu0 0.0
    %290 = vmatprep.subr.mxu0 0.0
    %291 = vmatpush1.msra.mxu0 0.0
    %292 = vmatprep.subr.mxu0 0.0
    %293 = vmatpush1.msra.mxu0 0.0
    %294 = vmatprep.subr.mxu0 0.0
    %295 = vmatpush1.msra.mxu0 0.0
    %296 = vmatprep.subr.mxu0 0.0
    %297 = vmatpush1.msra.mxu0 0.0
    %298 = vmatprep.subr.mxu0 0.0
    %299 = vmatpush1.msra.mxu0 0.0
    %300 = vmatprep.subr.mxu0 0.0
    %301 = vmatpush1.msra.mxu0 0.0
    %302 = vmatprep.subr.mxu0 0.0
    %303 = vmatpush1.msra.mxu0 0.0
    %304 = vmatprep.mubr.f32.mxu0 0.0
    %305 = vmatmul.mubr.f32.gmra.mrb[0].mxu0 %v238
    %v306 = vpop.f32.mrb[0].mxu0
    %v307 = vadd.f32 %v236, %v306
    %v308 = vpop.f32.mrb[0].mxu0
    %309 = vdwg.mxu0
    %v310 = vmax.f32 %v307, 0.0
    %s311 = scalar_lea.vmem [#allocation6], 80
    %v312 = vld [vmem:[%s311] sm:$0xff]
    %v313 = vld [vmem:[%s311 + $0x8] sm:$0xff]
    %v314 = vld [vmem:[%s311 + $0x10] sm:$0xff]
    %v315 = vld [vmem:[%s311 + $0x18] sm:$0xff]
    %v316 = vld [vmem:[%s311 + $0x20] sm:$0xff]
    %v317 = vlaneseq
    %v318 = vshrl.u32 %v317, 7
    %v319 = vsub.s32 3, %v318
    %v320 = vrot.slane %v57, %v319
    %v322 = vsel %vm152, %v310, 0
    %324 = vmatprep.subr.mxu0 0.0
    %325 = vmatpush1.msra.mxu0 %v312
    %326 = vmatprep.subr.mxu0 0.0
    %327 = vmatpush1.msra.mxu0 %v313
    %328 = vmatprep.subr.mxu0 0.0
    %329 = vmatpush1.msra.mxu0 %v314
    %330 = vmatprep.subr.mxu0 0.0
    %331 = vmatpush1.msra.mxu0 %v315
    %332 = vmatprep.subr.mxu0 0.0
    %333 = vmatpush1.msra.mxu0 %v316
    %334 = vmatprep.subr.mxu0 0.0
    %335 = vmatpush1.msra.mxu0 0.0
    %336 = vmatprep.subr.mxu0 0.0
    %337 = vmatpush1.msra.mxu0 0.0
    %338 = vmatprep.subr.mxu0 0.0
    %339 = vmatpush1.msra.mxu0 0.0
    %340 = vmatprep.subr.mxu0 0.0
    %341 = vmatpush1.msra.mxu0 0.0
    %342 = vmatprep.subr.mxu0 0.0
    %343 = vmatpush1.msra.mxu0 0.0
    %344 = vmatprep.subr.mxu0 0.0
    %345 = vmatpush1.msra.mxu0 0.0
    %346 = vmatprep.subr.mxu0 0.0
    %347 = vmatpush1.msra.mxu0 0.0
    %348 = vmatprep.subr.mxu0 0.0
    %349 = vmatpush1.msra.mxu0 0.0
    %350 = vmatprep.subr.mxu0 0.0
    %351 = vmatpush1.msra.mxu0 0.0
    %352 = vmatprep.subr.mxu0 0.0
    %353 = vmatpush1.msra.mxu0 0.0
    %354 = vmatprep.subr.mxu0 0.0
    %355 = vmatpush1.msra.mxu0 0.0
    %356 = vmatprep.subr.mxu0 0.0
    %357 = vmatpush1.msra.mxu0 0.0
    %358 = vmatprep.subr.mxu0 0.0
    %359 = vmatpush1.msra.mxu0 0.0
    %360 = vmatprep.subr.mxu0 0.0
    %361 = vmatpush1.msra.mxu0 0.0
    %362 = vmatprep.subr.mxu0 0.0
    %363 = vmatpush1.msra.mxu0 0.0
    %364 = vmatprep.subr.mxu0 0.0
    %365 = vmatpush1.msra.mxu0 0.0
    %366 = vmatprep.subr.mxu0 0.0
    %367 = vmatpush1.msra.mxu0 0.0
    %368 = vmatprep.subr.mxu0 0.0
    %369 = vmatpush1.msra.mxu0 0.0
    %370 = vmatprep.subr.mxu0 0.0
    %371 = vmatpush1.msra.mxu0 0.0
    %372 = vmatprep.subr.mxu0 0.0
    %373 = vmatpush1.msra.mxu0 0.0
    %374 = vmatprep.subr.mxu0 0.0
    %375 = vmatpush1.msra.mxu0 0.0
    %376 = vmatprep.subr.mxu0 0.0
    %377 = vmatpush1.msra.mxu0 0.0
    %378 = vmatprep.subr.mxu0 0.0
    %379 = vmatpush1.msra.mxu0 0.0
    %380 = vmatprep.subr.mxu0 0.0
    %381 = vmatpush1.msra.mxu0 0.0
    %382 = vmatprep.subr.mxu0 0.0
    %383 = vmatpush1.msra.mxu0 0.0
    %384 = vmatprep.subr.mxu0 0.0
    %385 = vmatpush1.msra.mxu0 0.0
    %386 = vmatprep.subr.mxu0 0.0
    %387 = vmatpush1.msra.mxu0 0.0
    %388 = vmatprep.mubr.f32.mxu0 0.0
    %389 = vmatmul.mubr.f32.gmra.mrb[0].mxu0 %v322
    %v390 = vpop.f32.mrb[0].mxu0
    %v391 = vadd.f32 %v320, %v390
    %v392 = vpop.f32.mrb[0].mxu0
    %393 = vdwg.mxu0
    %395 = vrot.lane.b32.xlu0 %v391, 1
    %v396 = vpop.permute.xlu0 %395
    %v398 = vsub.f32 %v391, %v396
    %v399 = vsub.f32 0.0, %v398
    %v400 = vmul.f32 %v399, 1.442695
    %v401 = vpow.pop %v400
    %v402 = vadd.f32 %v401, 1.0
    %v403 = vrcp.pop %v402
    %v404 = vmul.f32 1.0, %v403
    %v405 = vsub.f32 1.0, %v404
    %v406 = vlaneseq
    %v407 = vand.u32 %v406, 127
    %vm408 = vcmp.eq.s32.totalorder %v407, 0
    %410 = vset.pattern.permute.xlu0 1
    %411 = vperm.xlu0 %410, %v405
    %v412 = vpop.permute.xlu0 %411
    %415 = vset.pattern.permute.xlu0 1
    %416 = vperm.xlu0 %415, %v404
    %v417 = vpop.permute.xlu0 %416
    %v419 = vsel %vm408, %v412, %v417
    %vm420 = vcmask 15360
    %421 = vst.msk [vmem:[%s4] sm:$0xff] %vm420, %v419
    // Predicated region
    $region30: #{tpu_custom_call.1} parent=1 // pred_check
      _
    $region31: #{tpu_custom_call.1} parent=1 // pred_check_branch
      %423 = sbr.rel (0) target = $region33
    $region32: #{tpu_custom_call.1} parent=1 // pred_region
      _
    $region33: #{tpu_custom_call.1} parent=1 // pred_fallthru
      _
    // Predicated region
    $region34: #{tpu_custom_call.1} parent=1 // pred_check
      _
    $region35: #{tpu_custom_call.1} parent=1 // pred_check_branch
      %425 = sbr.rel (0) target = $region37
    $region36: #{tpu_custom_call.1} parent=1 // pred_region
      _
    $region37: #{tpu_custom_call.1} parent=1 // pred_fallthru
      _
    %426 = vsyncpa [#allocation3], 1
    %427 = vsyncpa [#allocation5], 1

</llo_original>
